<compile_context>
chip_gen: v6e
topology: v6e:2x2x1
jax: 0.10.0
libtpu: 0.0.40
codegen_flags: <defaults>
</compile_context>

<pallas_src>
import functools

import jax
import jax.numpy as jnp
from jax import lax
from jax.experimental import pallas as pl
from jax.experimental.pallas import tpu as pltpu

EPS = 1e-10


# ---------------------------------------------------------------------------
# Pallas kernel: entire HyperGraphconv forward (joint mode, order=2)
# ---------------------------------------------------------------------------
def hypergraph_kernel(x_ref, inc_ref, adj_ref, w_gcn_ref, b_gcn_ref,
                      gamma_ref, beta_ref, w_intra_ref, w_inter_ref,
                      w_mat_ref, out_ref, *, drug_num):
    N = x_ref.shape[0]
    d_out = w_gcn_ref.shape[1]

    x = x_ref[...]
    inc = inc_ref[...]
    adj = adj_ref[...]
    w_mat = w_mat_ref[...]                                   # (1, N)

    # ---- hypergraph degree normalizers (safe pow, no eye) -------------------
    de = jnp.sum(adj, axis=0, keepdims=True)                 # (1, N) col-sum
    invde = jnp.where(de == 0.0, 0.0, pl.reciprocal(de, approx=False))

    h = adj * w_mat                                          # (N, N)
    dv = jnp.sum(h, axis=1, keepdims=True)                   # (N, 1)
    invdv = jnp.where(dv <= 0.0, 0.0, lax.rsqrt(dv))
    h = h * invde                                            # column-scaled

    # ---- drdi_gcn: GraphConvolution + tanh, A never materialized ------------
    # A @ support == invdv * (h @ (adj.T @ (invdv * support)))
    support = jnp.dot(x, w_gcn_ref[...], preferred_element_type=jnp.float32)
    z = invdv * support                                      # (N, d_out)
    t = lax.dot_general(adj, z, (((0,), (0,)), ((), ())),    # adj.T @ z
                        preferred_element_type=jnp.float32)
    gcn_out = invdv * jnp.dot(h, t, preferred_element_type=jnp.float32)
    gcn_out = jnp.tanh(gcn_out + b_gcn_ref[...])

    # ---- Normal(mode='b'): node-axis normalization, unbiased std ------------
    mean = jnp.mean(gcn_out, axis=0, keepdims=True)
    var = jnp.sum((gcn_out - mean) ** 2, axis=0, keepdims=True) / (N - 1)
    std = jnp.sqrt(var)
    f_inter = (gamma_ref[...] * (gcn_out - mean) / (std + EPS)
               + beta_ref[...])

    # ---- n_order_featrue(x, n=2) --------------------------------------------
    fi = jnp.dot(x, w_intra_ref[...], preferred_element_type=jnp.float32)

    # fused incidence matmul: inc @ [fi | fi*fi] in one MXU pass
    fcat = jnp.concatenate([fi, fi * fi], axis=1)            # (N, 2*d_out)
    agg = jnp.dot(inc, fcat, preferred_element_type=jnp.float32)
    first_order = agg[:, :d_out]
    agg_sq = agg[:, d_out:]

    rowsum = jnp.sum(adj, axis=1, keepdims=True)             # (N, 1)
    norm = rowsum * (rowsum - 1.0) * 0.5                     # C(rowsum, 2)
    norm = jnp.where(norm == 0.0, 0.0, pl.reciprocal(norm, approx=False))

    # single w_inter matmul shared by drug / disease rows
    row_id = lax.broadcasted_iota(jnp.int32, (N, d_out), 0)
    is_drug = row_id < drug_num
    lhs = jnp.where(is_drug, fi, first_order)
    other = jnp.where(is_drug, first_order, fi)
    order1 = jnp.dot(lhs, w_inter_ref[...],
                     preferred_element_type=jnp.float32) * other

    order2 = (first_order * first_order - agg_sq) * 0.5
    ord_feat = norm * (order1 + order2)

    # single lane-dense output: [f_inter | order]
    out_ref[...] = jnp.concatenate([f_inter, ord_feat], axis=1)


# ---------------------------------------------------------------------------
# wrapper
# ---------------------------------------------------------------------------
def hypergraph_forward(x, incidence, params, drug_num):
    N, d_in = x.shape
    d_out = params["w_gcn"].shape[1]

    # PyTorch does this once at __init__ (_preprocess); keep it out of the
    # kernel so no iota/eye buffers live in VMEM.
    adj = incidence + jnp.eye(N, dtype=incidence.dtype)

    kernel = functools.partial(hypergraph_kernel, drug_num=drug_num)
    vmem = pl.BlockSpec(memory_space=pltpu.MemorySpace.VMEM)

    # rough live-set estimate (f32): 3 NxN + ~12 N x d_out + small weights
    est = 4 * (3 * N * N + N * (d_in + 12 * d_out) + 2 * d_in * d_out
               + d_out * d_out) * 2
    vmem_limit = int(min(max(est, 32 * 1024 * 1024), 64 * 1024 * 1024))

    flops = (4 * N * d_in * d_out          # x@w_gcn, x@w_intra
             + 8 * N * N * d_out           # adj.T@z, h@t, inc@[fi|fi^2]
             + 2 * N * d_out * d_out)      # lhs@w_inter
    transcendentals = N * d_out + 4 * N
    bytes_accessed = 4 * (N * d_in + 2 * N * N + 2 * d_in * d_out
                          + d_out * d_out + 4 * N * d_out + 2 * N + d_out)

    out = pl.pallas_call(
        kernel,
        out_shape=jax.ShapeDtypeStruct((N, 2 * d_out), jnp.float32),
        in_specs=[vmem] * 10,
        out_specs=vmem,
        compiler_params=pltpu.CompilerParams(vmem_limit_bytes=vmem_limit),
        cost_estimate=pl.CostEstimate(flops=flops,
                                      transcendentals=transcendentals,
                                      bytes_accessed=bytes_accessed),
    )(x, incidence, adj, params["w_gcn"], params["b_gcn"], params["gamma"],
      params["beta"], params["w_intra"], params["w_inter"],
      params["w_matrix"])
    return out


# ---------------------------------------------------------------------------
# plain-JAX reference (mirrors the PyTorch forward exactly, for validation)
# ---------------------------------------------------------------------------
def _safe_pow(x, p):
    y = x ** p
    return jnp.where(jnp.isinf(y), 0.0, y)


def reference_forward(x, incidence, params, drug_num):
    N = x.shape[0]
    adj = incidence + jnp.eye(N, dtype=jnp.float32)
    invde = _safe_pow(jnp.sum(adj, axis=0, keepdims=True), -1.0)

    h = adj * params["w_matrix"]
    invdv = _safe_pow(jnp.sum(h, axis=1, keepdims=True), -0.5)
    h = h * invde
    A = invdv * (h @ adj.T) * invdv.T

    gcn_out = jnp.tanh(A @ (x @ params["w_gcn"]) + params["b_gcn"])
    mean = jnp.mean(gcn_out, axis=0, keepdims=True)
    std = jnp.sqrt(jnp.sum((gcn_out - mean) ** 2, axis=0, keepdims=True) / (N - 1))
    f_inter = params["gamma"] * (gcn_out - mean) / (std + EPS) + params["beta"]

    fi = x @ params["w_intra"]
    drug, disease = fi[:drug_num], fi[drug_num:]
    rowsum = jnp.sum(adj, axis=1, keepdims=True)
    norm = _safe_pow(rowsum * (rowsum - 1.0) / 2.0, -1.0)
    first_order = incidence @ fi
    o1_dr = (drug @ params["w_inter"]) * first_order[:drug_num]
    o1_di = (first_order[drug_num:] @ params["w_inter"]) * disease
    order1 = jnp.concatenate([o1_dr, o1_di], axis=0)
    order2 = (first_order ** 2 - incidence @ (fi ** 2)) / 2.0
    ord_feat = norm * (order1 + order2)

    return jnp.concatenate([f_inter, ord_feat], axis=1)


# ---------------------------------------------------------------------------
# main
# ---------------------------------------------------------------------------
if __name__ == "__main__":
    drug_num, disease_num = 8, 8
    N = drug_num + disease_num
    input_dim, output_dim = 32, 32

    key = jax.random.PRNGKey(0)
    k_inc, k_x, k_wg, k_wi, k_wr = jax.random.split(key, 5)

    # synthetic binary incidence matrix (square, as required by adj = H + I)
    incidence = jax.random.bernoulli(k_inc, 0.3, (N, N)).astype(jnp.float32)
    x = jax.random.normal(k_x, (N, input_dim), dtype=jnp.float32)

    def xavier_normal(k, fan_in, fan_out):
        std = (2.0 / (fan_in + fan_out)) ** 0.5
        return std * jax.random.normal(k, (fan_in, fan_out), dtype=jnp.float32)

    params = {
        "w_gcn": xavier_normal(k_wg, input_dim, output_dim),     # GraphConvolution.weight
        "b_gcn": jnp.zeros((1, output_dim), jnp.float32),        # GraphConvolution.bias
        "gamma": jnp.ones((N, output_dim), jnp.float32),         # Normal.gamma
        "beta": jnp.zeros((N, output_dim), jnp.float32),         # Normal.bias
        "w_intra": xavier_normal(k_wi, input_dim, output_dim),   # intra_w[0]
        "w_inter": xavier_normal(k_wr, output_dim, output_dim),  # inter_r[0]
        "w_matrix": jnp.ones((1, N), jnp.float32),               # hyperedge weights
    }

    out = hypergraph_forward(x, incidence, params, drug_num)
    out = jax.block_until_ready(out)

    ref = reference_forward(x, incidence, params, drug_num)
    max_diff = float(jnp.max(jnp.abs(out - ref)))
    if max_diff > 1e-3:
        raise RuntimeError(f"kernel mismatch vs reference: max_diff={max_diff}")

    print("KERNEL_OK")
</pallas_src>

<mosaic_0001>
module attributes {stable_mosaic.version = 11 : i64} {
  func.func @hypergraph_kernel(%arg0: memref<16x32xf32, #tpu.memory_space<vmem>>, %arg1: memref<16x16xf32, #tpu.memory_space<vmem>>, %arg2: memref<16x16xf32, #tpu.memory_space<vmem>>, %arg3: memref<32x32xf32, #tpu.memory_space<vmem>>, %arg4: memref<1x32xf32, #tpu.memory_space<vmem>>, %arg5: memref<16x32xf32, #tpu.memory_space<vmem>>, %arg6: memref<16x32xf32, #tpu.memory_space<vmem>>, %arg7: memref<32x32xf32, #tpu.memory_space<vmem>>, %arg8: memref<32x32xf32, #tpu.memory_space<vmem>>, %arg9: memref<1x16xf32, #tpu.memory_space<vmem>>, %arg10: memref<16x64xf32, #tpu.memory_space<vmem>>) attributes {dimension_semantics = [], scalar_prefetch = 0 : i64, scratch_operands = 0 : i64, tpu.core_type = #tpu.core_type<tc>} {
    %c0 = arith.constant 0 : index
    %c0_0 = arith.constant 0 : index
    %0 = vector.load %arg0[%c0, %c0_0] : memref<16x32xf32, #tpu.memory_space<vmem>>, vector<16x32xf32>
    %c0_1 = arith.constant 0 : index
    %c0_2 = arith.constant 0 : index
    %1 = vector.load %arg1[%c0_1, %c0_2] : memref<16x16xf32, #tpu.memory_space<vmem>>, vector<16x16xf32>
    %c0_3 = arith.constant 0 : index
    %c0_4 = arith.constant 0 : index
    %2 = vector.load %arg2[%c0_3, %c0_4] : memref<16x16xf32, #tpu.memory_space<vmem>>, vector<16x16xf32>
    %c0_5 = arith.constant 0 : index
    %c0_6 = arith.constant 0 : index
    %3 = vector.load %arg9[%c0_5, %c0_6] : memref<1x16xf32, #tpu.memory_space<vmem>>, vector<1x16xf32>
    %cst = arith.constant dense<0.000000e+00> : vector<16xf32>
    %4 = vector.multi_reduction <add>, %2, %cst [0] : vector<16x16xf32> to vector<16xf32>
    %5 = vector.shape_cast %4 : vector<16xf32> to vector<1x16xf32>
    %cst_7 = arith.constant 0.000000e+00 : f32
    %6 = vector.broadcast %cst_7 : f32 to vector<1x16xf32>
    %7 = arith.cmpf oeq, %5, %6 : vector<1x16xf32>
    %8 = tpu.reciprocal %5 : vector<1x16xf32> -> vector<1x16xf32>
    %cst_8 = arith.constant 0.000000e+00 : f32
    %9 = vector.broadcast %cst_8 : f32 to vector<1x16xf32>
    %10 = arith.select %7, %9, %8 : vector<1x16xi1>, vector<1x16xf32>
    %11 = vector.broadcast %3 : vector<1x16xf32> to vector<16x16xf32>
    %12 = arith.mulf %2, %11 : vector<16x16xf32>
    %cst_9 = arith.constant dense<0.000000e+00> : vector<16xf32>
    %13 = vector.multi_reduction <add>, %12, %cst_9 [1] : vector<16x16xf32> to vector<16xf32>
    %14 = vector.shape_cast %13 : vector<16xf32> to vector<16x1xf32>
    %cst_10 = arith.constant 0.000000e+00 : f32
    %15 = vector.broadcast %cst_10 : f32 to vector<16x1xf32>
    %16 = arith.cmpf ole, %14, %15 : vector<16x1xf32>
    %17 = math.rsqrt %14 : vector<16x1xf32>
    %cst_11 = arith.constant 0.000000e+00 : f32
    %18 = vector.broadcast %cst_11 : f32 to vector<16x1xf32>
    %19 = arith.select %16, %18, %17 : vector<16x1xi1>, vector<16x1xf32>
    %20 = vector.broadcast %10 : vector<1x16xf32> to vector<16x16xf32>
    %21 = arith.mulf %12, %20 : vector<16x16xf32>
    %c0_12 = arith.constant 0 : index
    %c0_13 = arith.constant 0 : index
    %22 = vector.load %arg3[%c0_12, %c0_13] : memref<32x32xf32, #tpu.memory_space<vmem>>, vector<32x32xf32>
    %cst_14 = arith.constant dense<0.000000e+00> : vector<16x32xf32>
    %23 = tpu.matmul %0, %22, %cst_14 {dimension_numbers = #tpu.dot_dimension_numbers<[1], [0], [0], [1], [0, 0, 1, 1], [], []>} : vector<16x32xf32>, vector<32x32xf32>, vector<16x32xf32> -> vector<16x32xf32>
    %24 = vector.broadcast %19 : vector<16x1xf32> to vector<16x32xf32>
    %25 = arith.mulf %24, %23 : vector<16x32xf32>
    %cst_15 = arith.constant dense<0.000000e+00> : vector<16x32xf32>
    %26 = tpu.matmul %2, %25, %cst_15 {dimension_numbers = #tpu.dot_dimension_numbers<[0], [0], [1], [1], [0, 1, 1, 1], [], []>} : vector<16x16xf32>, vector<16x32xf32>, vector<16x32xf32> -> vector<16x32xf32>
    %cst_16 = arith.constant dense<0.000000e+00> : vector<16x32xf32>
    %27 = tpu.matmul %21, %26, %cst_16 {dimension_numbers = #tpu.dot_dimension_numbers<[1], [0], [0], [1], [0, 0, 1, 1], [], []>} : vector<16x16xf32>, vector<16x32xf32>, vector<16x32xf32> -> vector<16x32xf32>
    %28 = vector.broadcast %19 : vector<16x1xf32> to vector<16x32xf32>
    %29 = arith.mulf %28, %27 : vector<16x32xf32>
    %c0_17 = arith.constant 0 : index
    %c0_18 = arith.constant 0 : index
    %30 = vector.load %arg4[%c0_17, %c0_18] : memref<1x32xf32, #tpu.memory_space<vmem>>, vector<1x32xf32>
    %31 = vector.broadcast %30 : vector<1x32xf32> to vector<16x32xf32>
    %32 = arith.addf %29, %31 : vector<16x32xf32>
    %33 = math.tanh %32 : vector<16x32xf32>
    %cst_19 = arith.constant dense<0.000000e+00> : vector<32xf32>
    %34 = vector.multi_reduction <add>, %33, %cst_19 [0] : vector<16x32xf32> to vector<32xf32>
    %35 = vector.shape_cast %34 : vector<32xf32> to vector<1x32xf32>
    %cst_20 = arith.constant 1.600000e+01 : f32
    %36 = vector.broadcast %cst_20 : f32 to vector<1x32xf32>
    %37 = arith.divf %35, %36 : vector<1x32xf32>
    %38 = vector.broadcast %37 : vector<1x32xf32> to vector<16x32xf32>
    %39 = arith.subf %33, %38 : vector<16x32xf32>
    %40 = arith.mulf %39, %39 : vector<16x32xf32>
    %cst_21 = arith.constant dense<0.000000e+00> : vector<32xf32>
    %41 = vector.multi_reduction <add>, %40, %cst_21 [0] : vector<16x32xf32> to vector<32xf32>
    %42 = vector.shape_cast %41 : vector<32xf32> to vector<1x32xf32>
    %cst_22 = arith.constant 1.500000e+01 : f32
    %43 = vector.broadcast %cst_22 : f32 to vector<1x32xf32>
    %44 = arith.divf %42, %43 : vector<1x32xf32>
    %45 = math.sqrt %44 : vector<1x32xf32>
    %c0_23 = arith.constant 0 : index
    %c0_24 = arith.constant 0 : index
    %46 = vector.load %arg5[%c0_23, %c0_24] : memref<16x32xf32, #tpu.memory_space<vmem>>, vector<16x32xf32>
    %47 = vector.broadcast %37 : vector<1x32xf32> to vector<16x32xf32>
    %48 = arith.subf %33, %47 : vector<16x32xf32>
    %49 = arith.mulf %46, %48 : vector<16x32xf32>
    %cst_25 = arith.constant 1.000000e-10 : f32
    %50 = vector.broadcast %cst_25 : f32 to vector<1x32xf32>
    %51 = arith.addf %45, %50 : vector<1x32xf32>
    %52 = vector.broadcast %51 : vector<1x32xf32> to vector<16x32xf32>
    %53 = arith.divf %49, %52 : vector<16x32xf32>
    %c0_26 = arith.constant 0 : index
    %c0_27 = arith.constant 0 : index
    %54 = vector.load %arg6[%c0_26, %c0_27] : memref<16x32xf32, #tpu.memory_space<vmem>>, vector<16x32xf32>
    %55 = arith.addf %53, %54 : vector<16x32xf32>
    %c0_28 = arith.constant 0 : index
    %c0_29 = arith.constant 0 : index
    %56 = vector.load %arg7[%c0_28, %c0_29] : memref<32x32xf32, #tpu.memory_space<vmem>>, vector<32x32xf32>
    %cst_30 = arith.constant dense<0.000000e+00> : vector<16x32xf32>
    %57 = tpu.matmul %0, %56, %cst_30 {dimension_numbers = #tpu.dot_dimension_numbers<[1], [0], [0], [1], [0, 0, 1, 1], [], []>} : vector<16x32xf32>, vector<32x32xf32>, vector<16x32xf32> -> vector<16x32xf32>
    %58 = arith.mulf %57, %57 : vector<16x32xf32>
    %59 = tpu.concatenate %57, %58 in 1 : vector<16x32xf32>, vector<16x32xf32> -> vector<16x64xf32>
    %cst_31 = arith.constant dense<0.000000e+00> : vector<16x64xf32>
    %60 = tpu.matmul %1, %59, %cst_31 {dimension_numbers = #tpu.dot_dimension_numbers<[1], [0], [0], [1], [0, 0, 1, 1], [], []>} : vector<16x16xf32>, vector<16x64xf32>, vector<16x64xf32> -> vector<16x64xf32>
    %61 = vector.extract_strided_slice %60 {offsets = [0, 0], sizes = [16, 32], strides = [1, 1]} : vector<16x64xf32> to vector<16x32xf32>
    %62 = vector.extract_strided_slice %60 {offsets = [0, 32], sizes = [16, 32], strides = [1, 1]} : vector<16x64xf32> to vector<16x32xf32>
    %cst_32 = arith.constant dense<0.000000e+00> : vector<16xf32>
    %63 = vector.multi_reduction <add>, %2, %cst_32 [1] : vector<16x16xf32> to vector<16xf32>
    %64 = vector.shape_cast %63 : vector<16xf32> to vector<16x1xf32>
    %cst_33 = arith.constant 1.000000e+00 : f32
    %65 = vector.broadcast %cst_33 : f32 to vector<16x1xf32>
    %66 = arith.subf %64, %65 : vector<16x1xf32>
    %67 = arith.mulf %64, %66 : vector<16x1xf32>
    %cst_34 = arith.constant 5.000000e-01 : f32
    %68 = vector.broadcast %cst_34 : f32 to vector<16x1xf32>
    %69 = arith.mulf %67, %68 : vector<16x1xf32>
    %cst_35 = arith.constant 0.000000e+00 : f32
    %70 = vector.broadcast %cst_35 : f32 to vector<16x1xf32>
    %71 = arith.cmpf oeq, %69, %70 : vector<16x1xf32>
    %72 = tpu.reciprocal %69 : vector<16x1xf32> -> vector<16x1xf32>
    %cst_36 = arith.constant 0.000000e+00 : f32
    %73 = vector.broadcast %cst_36 : f32 to vector<16x1xf32>
    %74 = arith.select %71, %73, %72 : vector<16x1xi1>, vector<16x1xf32>
    %75 = tpu.iota {dimensions = array<i32: 0>} : vector<16x32xi32>
    %c8_i32 = arith.constant 8 : i32
    %76 = vector.broadcast %c8_i32 : i32 to vector<16x32xi32>
    %77 = arith.cmpi slt, %75, %76 : vector<16x32xi32>
    %78 = arith.select %77, %57, %61 : vector<16x32xi1>, vector<16x32xf32>
    %79 = arith.select %77, %61, %57 : vector<16x32xi1>, vector<16x32xf32>
    %c0_37 = arith.constant 0 : index
    %c0_38 = arith.constant 0 : index
    %80 = vector.load %arg8[%c0_37, %c0_38] : memref<32x32xf32, #tpu.memory_space<vmem>>, vector<32x32xf32>
    %cst_39 = arith.constant dense<0.000000e+00> : vector<16x32xf32>
    %81 = tpu.matmul %78, %80, %cst_39 {dimension_numbers = #tpu.dot_dimension_numbers<[1], [0], [0], [1], [0, 0, 1, 1], [], []>} : vector<16x32xf32>, vector<32x32xf32>, vector<16x32xf32> -> vector<16x32xf32>
    %82 = arith.mulf %81, %79 : vector<16x32xf32>
    %83 = arith.mulf %61, %61 : vector<16x32xf32>
    %84 = arith.subf %83, %62 : vector<16x32xf32>
    %cst_40 = arith.constant 5.000000e-01 : f32
    %85 = vector.broadcast %cst_40 : f32 to vector<16x32xf32>
    %86 = arith.mulf %84, %85 : vector<16x32xf32>
    %87 = arith.addf %82, %86 : vector<16x32xf32>
    %88 = vector.broadcast %74 : vector<16x1xf32> to vector<16x32xf32>
    %89 = arith.mulf %88, %87 : vector<16x32xf32>
    %90 = tpu.concatenate %55, %89 in 1 : vector<16x32xf32>, vector<16x32xf32> -> vector<16x64xf32>
    %c0_41 = arith.constant 0 : index
    %c0_42 = arith.constant 0 : index
    %91 = vector.load %arg10[%c0_41, %c0_42] : memref<16x64xf32, #tpu.memory_space<vmem>>, vector<16x64xf32>
    tpu.vector_store %arg10[%c0_41, %c0_42], %90 {strides = array<i32>} : memref<16x64xf32, #tpu.memory_space<vmem>>, vector<16x64xf32>,
    return
  }
}

</mosaic_0001>

<llo_original>
// kernel: tpu_custom_call.1
$region0: #{tpu_custom_call.1}
  #allocation0 [shape = 'u32[]', space=smem, size = 0x4, offset = 0x4, fixed_abs, tag = 'smem constant byte address 0x4 - core index']
  #allocation1 [shape = 'u32[144,128]{1,0:T(1,128)}', space=vmem, size = 0x12000, scoped, tag = 'internal scratch']
  %s0 = inlined_call_operand.hbm [shape: f32[16,32], index: 0, kind: input, shape index: {}]
  %s1 = inlined_call_operand.hbm [shape: f32[16,16], index: 1, kind: input, shape index: {}]
  %s2 = inlined_call_operand.hbm [shape: f32[16,16], index: 2, kind: input, shape index: {}]
  %s3 = inlined_call_operand.hbm [shape: f32[32,32], index: 3, kind: input, shape index: {}]
  %s4 = inlined_call_operand.vmem [shape: f32[1,32], index: 4, kind: input, shape index: {}]
  %s5 = inlined_call_operand.hbm [shape: f32[16,32], index: 5, kind: input, shape index: {}]
  %s6 = inlined_call_operand.hbm [shape: f32[16,32], index: 6, kind: input, shape index: {}]
  %s7 = inlined_call_operand.hbm [shape: f32[32,32], index: 7, kind: input, shape index: {}]
  %s8 = inlined_call_operand.hbm [shape: f32[32,32], index: 8, kind: input, shape index: {}]
  %s9 = inlined_call_operand.vmem [shape: f32[1,16], index: 9, kind: input, shape index: {}]
  %s10 = inlined_call_operand.hbm [shape: f32[16,64], index: 10, kind: output, shape index: {}]
  %s11 = sld [smem:[#allocation0]]
  $region82: #{tpu_custom_call.1} parent=0
    _
  %s13 = ssub.s32 1, %s11
  %s14 = scalar_select 0, %s13, %s11
  $region1: #{tpu_custom_call.1} parent=0
    #allocation2 [shape = 'u8[8192]{0}', space=vmem, size = 0x2000, scoped, tag = 'input window, operand 0, single buffered']
    #allocation3 [shape = 's32[1]{0}', space=sflag, size = 0x4, scoped, tag = 'scoped memory for tpu_custom_call.1']
    #allocation4 [shape = 's32[1]{0}', space=sflag, size = 0x4, scoped, tag = 'scoped memory for tpu_custom_call.1']
    #allocation5 [shape = 'u8[8192]{0}', space=vmem, size = 0x2000, scoped, tag = 'input window, operand 1, single buffered']
    #allocation6 [shape = 's32[1]{0}', space=sflag, size = 0x4, scoped, tag = 'scoped memory for tpu_custom_call.1']
    #allocation7 [shape = 'u8[8192]{0}', space=vmem, size = 0x2000, scoped, tag = 'input window, operand 2, single buffered']
    #allocation8 [shape = 'u8[16384]{0}', space=vmem, size = 0x4000, scoped, tag = 'input window, operand 3, single buffered']
    #allocation9 [shape = 's32[1]{0}', space=sflag, size = 0x4, scoped, tag = 'scoped memory for tpu_custom_call.1']
    #allocation10 [shape = 'u8[8192]{0}', space=vmem, size = 0x2000, scoped, tag = 'input window, operand 5, single buffered']
    #allocation11 [shape = 'u8[8192]{0}', space=vmem, size = 0x2000, scoped, tag = 'input window, operand 6, single buffered']
    #allocation12 [shape = 's32[1]{0}', space=sflag, size = 0x4, scoped, tag = 'scoped memory for tpu_custom_call.1']
    #allocation13 [shape = 'u8[16384]{0}', space=vmem, size = 0x4000, scoped, tag = 'input window, operand 7, single buffered']
    #allocation14 [shape = 'u8[16384]{0}', space=vmem, size = 0x4000, scoped, tag = 'input window, operand 8, single buffered']
    #allocation15 [shape = 's32[1]{0}', space=sflag, size = 0x4, scoped, tag = 'scoped memory for tpu_custom_call.1']
    #allocation16 [shape = 'u8[8192]{0}', space=vmem, size = 0x2000, scoped, tag = 'output window, operand 0, single buffered']
    %15 = vsyncpa [#allocation3], 0
    %16 = vsyncpa [#allocation6], 0
    %17 = vsyncpa [#allocation9], 0
    %18 = vsyncpa [#allocation12], 0
    %19 = vsyncpa [#allocation15], 0
    %20 = vsyncpa [#allocation4], 0
    // Predicated region
    $region2: #{tpu_custom_call.1} parent=1 // pred_check
      _
    $region3: #{tpu_custom_call.1} parent=1 // pred_check_branch
      %22 = sbr.rel (0) target = $region5
    $region4: #{tpu_custom_call.1} parent=1 // pred_region
      %s24 = ssub.s32 256, 256
      %25 = vsyncadd [#allocation3], %s24
      %s26 = sshll.u32 [#allocation2], 4
      %s27 = int_to_ptr.vmem [resolvable:$true] %s26
      %32 = dma.hbm_to_vmem [thread:$0]  %s0, 256, %s27, [#allocation3], 128, 128, 8
    $region5: #{tpu_custom_call.1} parent=1 // pred_fallthru
      _
    // Predicated region
    $region6: #{tpu_custom_call.1} parent=1 // pred_check
      _
    $region7: #{tpu_custom_call.1} parent=1 // pred_check_branch
      %34 = sbr.rel (0) target = $region9
    $region8: #{tpu_custom_call.1} parent=1 // pred_region
      %s36 = ssub.s32 256, 256
      %37 = vsyncadd [#allocation6], %s36
      %s38 = sshll.u32 [#allocation5], 4
      %s39 = int_to_ptr.vmem [resolvable:$true] %s38
      %44 = dma.hbm_to_vmem [thread:$0]  %s1, 256, %s39, [#allocation6], 128, 128, 8
    $region9: #{tpu_custom_call.1} parent=1 // pred_fallthru
      _
    // Predicated region
    $region10: #{tpu_custom_call.1} parent=1 // pred_check
      _
    $region11: #{tpu_custom_call.1} parent=1 // pred_check_branch
      %46 = sbr.rel (0) target = $region13
    $region12: #{tpu_custom_call.1} parent=1 // pred_region
      %s48 = ssub.s32 256, 256
      %49 = vsyncadd [#allocation6], %s48
      %s50 = sshll.u32 [#allocation7], 4
      %s51 = int_to_ptr.vmem [resolvable:$true] %s50
      %56 = dma.hbm_to_vmem [thread:$0]  %s2, 256, %s51, [#allocation6], 128, 128, 8
    $region13: #{tpu_custom_call.1} parent=1 // pred_fallthru
      _
    // Predicated region
    $region14: #{tpu_custom_call.1} parent=1 // pred_check
      _
    $region15: #{tpu_custom_call.1} parent=1 // pred_check_branch
      %58 = sbr.rel (0) target = $region17
    $region16: #{tpu_custom_call.1} parent=1 // pred_region
      %s60 = ssub.s32 512, 512
      %61 = vsyncadd [#allocation9], %s60
      %s62 = sshll.u32 [#allocation8], 4
      %s63 = int_to_ptr.vmem [resolvable:$true] %s62
      %68 = dma.hbm_to_vmem [thread:$0]  %s3, 512, %s63, [#allocation9], 128, 128, 8
    $region17: #{tpu_custom_call.1} parent=1 // pred_fallthru
      _
    // Predicated region
    $region18: #{tpu_custom_call.1} parent=1 // pred_check
      _
    $region19: #{tpu_custom_call.1} parent=1 // pred_check_branch
      %70 = sbr.rel (0) target = $region21
    $region20: #{tpu_custom_call.1} parent=1 // pred_region
      _
    $region21: #{tpu_custom_call.1} parent=1 // pred_fallthru
      _
    // Predicated region
    $region22: #{tpu_custom_call.1} parent=1 // pred_check
      _
    $region23: #{tpu_custom_call.1} parent=1 // pred_check_branch
      %72 = sbr.rel (0) target = $region25
    $region24: #{tpu_custom_call.1} parent=1 // pred_region
      %s74 = ssub.s32 256, 256
      %75 = vsyncadd [#allocation9], %s74
      %s76 = sshll.u32 [#allocation10], 4
      %s77 = int_to_ptr.vmem [resolvable:$true] %s76
      %82 = dma.hbm_to_vmem [thread:$0]  %s5, 256, %s77, [#allocation9], 128, 128, 8
    $region25: #{tpu_custom_call.1} parent=1 // pred_fallthru
      _
    // Predicated region
    $region26: #{tpu_custom_call.1} parent=1 // pred_check
      _
    $region27: #{tpu_custom_call.1} parent=1 // pred_check_branch
      %84 = sbr.rel (0) target = $region29
    $region28: #{tpu_custom_call.1} parent=1 // pred_region
      %s86 = ssub.s32 256, 256
      %87 = vsyncadd [#allocation12], %s86
      %s88 = sshll.u32 [#allocation11], 4
      %s89 = int_to_ptr.vmem [resolvable:$true] %s88
      %94 = dma.hbm_to_vmem [thread:$0]  %s6, 256, %s89, [#allocation12], 128, 128, 8
    $region29: #{tpu_custom_call.1} parent=1 // pred_fallthru
      _
    // Predicated region
    $region30: #{tpu_custom_call.1} parent=1 // pred_check
      _
    $region31: #{tpu_custom_call.1} parent=1 // pred_check_branch
      %96 = sbr.rel (0) target = $region33
    $region32: #{tpu_custom_call.1} parent=1 // pred_region
      %s98 = ssub.s32 512, 512
      %99 = vsyncadd [#allocation12], %s98
      %s100 = sshll.u32 [#allocation13], 4
      %s101 = int_to_ptr.vmem [resolvable:$true] %s100
      %106 = dma.hbm_to_vmem [thread:$0]  %s7, 512, %s101, [#allocation12], 128, 128, 8
    $region33: #{tpu_custom_call.1} parent=1 // pred_fallthru
      _
    // Predicated region
    $region34: #{tpu_custom_call.1} parent=1 // pred_check
      _
    $region35: #{tpu_custom_call.1} parent=1 // pred_check_branch
      %108 = sbr.rel (0) target = $region37
    $region36: #{tpu_custom_call.1} parent=1 // pred_region
      %s110 = ssub.s32 512, 512
      %111 = vsyncadd [#allocation15], %s110
      %s112 = sshll.u32 [#allocation14], 4
      %s113 = int_to_ptr.vmem [resolvable:$true] %s112
      %118 = dma.hbm_to_vmem [thread:$0]  %s8, 512, %s113, [#allocation15], 128, 128, 8
    $region37: #{tpu_custom_call.1} parent=1 // pred_fallthru
      _
    // Predicated region
    $region38: #{tpu_custom_call.1} parent=1 // pred_check
      _
    $region39: #{tpu_custom_call.1} parent=1 // pred_check_branch
      %120 = sbr.rel (0) target = $region41
    $region40: #{tpu_custom_call.1} parent=1 // pred_region
      _
    $region41: #{tpu_custom_call.1} parent=1 // pred_fallthru
      _
    // Predicated region
    $region42: #{tpu_custom_call.1} parent=1 // pred_check
      _
    $region43: #{tpu_custom_call.1} parent=1 // pred_check_branch
      %122 = sbr.rel (0) target = $region45
    $region44: #{tpu_custom_call.1} parent=1 // pred_region
      %123 = dma.done [#allocation3], 256
    $region45: #{tpu_custom_call.1} parent=1 // pred_fallthru
      _
    // Predicated region
    $region46: #{tpu_custom_call.1} parent=1 // pred_check
      _
    $region47: #{tpu_custom_call.1} parent=1 // pred_check_branch
      %125 = sbr.rel (0) target = $region49
    $region48: #{tpu_custom_call.1} parent=1 // pred_region
      %126 = dma.done [#allocation6], 256
    $region49: #{tpu_custom_call.1} parent=1 // pred_fallthru
      _
    // Predicated region
    $region50: #{tpu_custom_call.1} parent=1 // pred_check
      _
    $region51: #{tpu_custom_call.1} parent=1 // pred_check_branch
      %128 = sbr.rel (0) target = $region53
    $region52: #{tpu_custom_call.1} parent=1 // pred_region
      %129 = dma.done [#allocation6], 256
    $region53: #{tpu_custom_call.1} parent=1 // pred_fallthru
      _
    // Predicated region
    $region54: #{tpu_custom_call.1} parent=1 // pred_check
      _
    $region55: #{tpu_custom_call.1} parent=1 // pred_check_branch
      %131 = sbr.rel (0) target = $region57
    $region56: #{tpu_custom_call.1} parent=1 // pred_region
      %132 = dma.done [#allocation9], 512
    $region57: #{tpu_custom_call.1} parent=1 // pred_fallthru
      _
    // Predicated region
    $region58: #{tpu_custom_call.1} parent=1 // pred_check
      _
    $region59: #{tpu_custom_call.1} parent=1 // pred_check_branch
      %134 = sbr.rel (0) target = $region61
    $region60: #{tpu_custom_call.1} parent=1 // pred_region
      %135 = dma.done [#allocation9], 256
    $region61: #{tpu_custom_call.1} parent=1 // pred_fallthru
      _
    // Predicated region
    $region62: #{tpu_custom_call.1} parent=1 // pred_check
      _
    $region63: #{tpu_custom_call.1} parent=1 // pred_check_branch
      %137 = sbr.rel (0) target = $region65
    $region64: #{tpu_custom_call.1} parent=1 // pred_region
      %138 = dma.done [#allocation12], 256
    $region65: #{tpu_custom_call.1} parent=1 // pred_fallthru
      _
    // Predicated region
    $region66: #{tpu_custom_call.1} parent=1 // pred_check
      _
    $region67: #{tpu_custom_call.1} parent=1 // pred_check_branch
      %140 = sbr.rel (0) target = $region69
    $region68: #{tpu_custom_call.1} parent=1 // pred_region
      %141 = dma.done [#allocation12], 512
    $region69: #{tpu_custom_call.1} parent=1 // pred_fallthru
      _
    // Predicated region
    $region70: #{tpu_custom_call.1} parent=1 // pred_check
      _
    $region71: #{tpu_custom_call.1} parent=1 // pred_check_branch
      %143 = sbr.rel (0) target = $region73
    $region72: #{tpu_custom_call.1} parent=1 // pred_region
      %144 = dma.done [#allocation15], 512
    $region73: #{tpu_custom_call.1} parent=1 // pred_fallthru
      _
    %v145 = vld [vmem:[#allocation2] sm:$0xff]
    %v146 = vld [vmem:[#allocation2 + $0x8] sm:$0xff]
    %v147 = vld [vmem:[#allocation5] sm:$0xff]
    %v148 = vld [vmem:[#allocation5 + $0x8] sm:$0xff]
    %v149 = vld [vmem:[#allocation7] sm:$0xff]
    %v150 = vld [vmem:[#allocation7 + $0x8] sm:$0xff]
    %v151 = vld [vmem:[%s9] sm:$0x1]
    %vm152 = vcmask 130048
    %v153 = vsel %vm152, %v149, 0.0
    %v154 = vsel %vm152, %v150, 0.0
    %v155 = vadd.f32 %v153, %v154
    %v156 = vrot.slane %v155, 4
    %v157 = vadd.f32 %v155, %v156
    %v158 = vrot.slane %v157, 2
    %v159 = vadd.f32 %v157, %v158
    %v160 = vrot.slane %v159, 1
    %v161 = vadd.f32 %v159, %v160
    %vm162 = vcmp.eq.f32.partialorder %v161, 0.0
    %v163 = vrcp.pop %v161
    %v164 = vsel %vm162, 0.0, %v163
    %v166 = vlaneseq
    %v167 = vshrl.u32 %v166, 7
    %v168 = vsub.s32 0, %v167
    %v169 = vrot.slane %v151, %v168
    %v171 = vmul.f32 %v149, %v169
    %v172 = vmul.f32 %v150, %v169
    %v173 = vsel %vm152, %v171, 0.0
    %174 = vadd.xlane.f32.xlu0 %v173
    %v175 = vpop.xlane.xlu0 %174
    %v176 = vsel %vm152, %v172, 0.0
    %177 = vadd.xlane.f32.xlu0 %v176
    %v178 = vpop.xlane.xlu0 %177
    %vm179 = vcmp.le.f32.partialorder %v175, 0.0
    %vm180 = vcmp.le.f32.partialorder %v178, 0.0
    %v181 = vrsqrt.pop %v175
    %v182 = vrsqrt.pop %v178
    %v183 = vsel %vm179, 0.0, %v181
    %v184 = vsel %vm180, 0.0, %v182
    %v185 = vmul.f32 %v171, %v164
    %v186 = vmul.f32 %v172, %v164
    %v187 = vld [vmem:[#allocation8] sm:$0xff]
    %v188 = vld [vmem:[#allocation8 + $0x8] sm:$0xff]
    %v189 = vld [vmem:[#allocation8 + $0x10] sm:$0xff]
    %v190 = vld [vmem:[#allocation8 + $0x18] sm:$0xff]
    %vm191 = vcmask 261120
    %v193 = vsel %vm191, %v145, 0
    %v196 = vsel %vm191, %v146, 0
    %198 = vmatprep.subr.mxu0 0.0
    %199 = vmatpush1.msra.mxu0 0.0
    %200 = vmatprep.subr.mxu0 0.0
    %201 = vmatpush1.msra.mxu0 0.0
    %202 = vmatprep.subr.mxu0 0.0
    %203 = vmatpush1.msra.mxu0 0.0
    %204 = vmatprep.subr.mxu0 0.0
    %205 = vmatpush1.msra.mxu0 0.0
    %206 = vmatprep.subr.mxu0 0.0
    %207 = vmatpush1.msra.mxu0 0.0
    %208 = vmatprep.subr.mxu0 0.0
    %209 = vmatpush1.msra.mxu0 0.0
    %210 = vmatprep.subr.mxu0 0.0
    %211 = vmatpush1.msra.mxu0 0.0
    %212 = vmatprep.subr.mxu0 0.0
    %213 = vmatpush1.msra.mxu0 0.0
    %214 = vmatprep.subr.mxu0 0.0
    %215 = vmatpush1.msra.mxu0 0.0
    %216 = vmatprep.subr.mxu0 0.0
    %217 = vmatpush1.msra.mxu0 0.0
    %218 = vmatprep.subr.mxu0 0.0
    %219 = vmatpush1.msra.mxu0 0.0
    %220 = vmatprep.subr.mxu0 0.0
    %221 = vmatpush1.msra.mxu0 0.0
    %222 = vmatprep.subr.mxu0 0.0
    %223 = vmatpush1.msra.mxu0 %v190
    %224 = vmatprep.subr.mxu0 0.0
    %225 = vmatpush1.msra.mxu0 %v189
    %226 = vmatprep.subr.mxu0 0.0
    %227 = vmatpush1.msra.mxu0 %v188
    %228 = vmatprep.subr.mxu0 0.0
    %229 = vmatpush1.msra.mxu0 %v187
    %230 = vmatprep.subr.mxu0 0.0
    %231 = vmatpush2.msra.mxu0 0.0
    %232 = vmatprep.subr.mxu0 0.0
    %233 = vmatpush2.msra.mxu0 0.0
    %234 = vmatprep.subr.mxu0 0.0
    %235 = vmatpush2.msra.mxu0 0.0
    %236 = vmatprep.subr.mxu0 0.0
    %237 = vmatpush2.msra.mxu0 0.0
    %238 = vmatprep.subr.mxu0 0.0
    %239 = vmatpush2.msra.mxu0 0.0
    %240 = vmatprep.subr.mxu0 0.0
    %241 = vmatpush2.msra.mxu0 0.0
    %242 = vmatprep.subr.mxu0 0.0
    %243 = vmatpush2.msra.mxu0 0.0
    %244 = vmatprep.subr.mxu0 0.0
    %245 = vmatpush2.msra.mxu0 0.0
    %246 = vmatprep.subr.mxu0 0.0
    %247 = vmatpush2.msra.mxu0 0.0
    %248 = vmatprep.subr.mxu0 0.0
    %249 = vmatpush2.msra.mxu0 0.0
    %250 = vmatprep.subr.mxu0 0.0
    %251 = vmatpush2.msra.mxu0 0.0
    %252 = vmatprep.subr.mxu0 0.0
    %253 = vmatpush2.msra.mxu0 0.0
    %254 = vmatprep.subr.mxu0 0.0
    %255 = vmatpush2.msra.mxu0 0.0
    %256 = vmatprep.subr.mxu0 0.0
    %257 = vmatpush2.msra.mxu0 0.0
    %258 = vmatprep.subr.mxu0 0.0
    %259 = vmatpush2.msra.mxu0 0.0
    %260 = vmatprep.subr.mxu0 0.0
    %261 = vmatpush2.msra.mxu0 0.0
    %262 = vmatprep.mubr.f32.mxu0 0.0
    %263 = vmatmul.mubr.f32.gmra.mxu0 %v193
    %v264 = vpop.f32.mrf.mxu0
    %v265 = vadd.f32 0.0, %v264
    %v266 = vpop.f32.mrf.mxu0
    %267 = vmatprep.mubr.f32.mxu0 0.0
    %268 = vmatmul.mubr.f32.gmra.mxu0 %v196
    %v269 = vpop.f32.mrf.mxu0
    %v270 = vadd.f32 0.0, %v269
    %v271 = vpop.f32.mrf.mxu0
    %272 = vdwg.mxu0
    %v273 = vmul.f32 %v183, %v265
    %v274 = vmul.f32 %v184, %v270
    %275 = vxpose.xlu0.b32.start [1/16] %v149, 128
    %276 = vxpose.xlu0.b32.cont [2/16] %v150, 128
    %277 = vxpose.xlu0.b32.cont [3/16] 0.0, 128
    %278 = vxpose.xlu0.b32.cont [4/16] 0.0, 128
    %279 = vxpose.xlu0.b32.cont [5/16] 0.0, 128
    %280 = vxpose.xlu0.b32.cont [6/16] 0.0, 128
    %281 = vxpose.xlu0.b32.cont [7/16] 0.0, 128
    %282 = vxpose.xlu0.b32.cont [8/16] 0.0, 128
    %283 = vxpose.xlu0.b32.cont [9/16] 0.0, 128
    %284 = vxpose.xlu0.b32.cont [10/16] 0.0, 128
    %285 = vxpose.xlu0.b32.cont [11/16] 0.0, 128
    %286 = vxpose.xlu0.b32.cont [12/16] 0.0, 128
    %287 = vxpose.xlu0.b32.cont [13/16] 0.0, 128
    %288 = vxpose.xlu0.b32.cont [14/16] 0.0, 128
    %289 = vxpose.xlu0.b32.cont [15/16] 0.0, 128
    %290 = vxpose.xlu0.b32.end [16/16] 0.0, 128
    %v291 = vpop.trf.xlu0
    %v292 = vpop.trf.xlu0
    %v293 = vpop.trf.xlu0
    %v294 = vpop.trf.xlu0
    %v295 = vpop.trf.xlu0
    %v296 = vpop.trf.xlu0
    %v297 = vpop.trf.xlu0
    %v298 = vpop.trf.xlu0
    %v299 = vpop.trf.xlu0
    %v300 = vpop.trf.xlu0
    %v301 = vpop.trf.xlu0
    %v302 = vpop.trf.xlu0
    %v303 = vpop.trf.xlu0
    %v304 = vpop.trf.xlu0
    %v305 = vpop.trf.xlu0
    %v306 = vpop.trf.xlu0
    %v308 = vsel %vm152, %v291, 0
    %v311 = vsel %vm152, %v292, 0
    %313 = vmatprep.subr.mxu0 0.0
    %314 = vmatpush1.msra.mxu0 0.0
    %315 = vmatprep.subr.mxu0 0.0
    %316 = vmatpush1.msra.mxu0 0.0
    %317 = vmatprep.subr.mxu0 0.0
    %318 = vmatpush1.msra.mxu0 0.0
    %319 = vmatprep.subr.mxu0 0.0
    %320 = vmatpush1.msra.mxu0 0.0
    %321 = vmatprep.subr.mxu0 0.0
    %322 = vmatpush1.msra.mxu0 0.0
    %323 = vmatprep.subr.mxu0 0.0
    %324 = vmatpush1.msra.mxu0 0.0
    %325 = vmatprep.subr.mxu0 0.0
    %326 = vmatpush1.msra.mxu0 0.0
    %327 = vmatprep.subr.mxu0 0.0
    %328 = vmatpush1.msra.mxu0 0.0
    %329 = vmatprep.subr.mxu0 0.0
    %330 = vmatpush1.msra.mxu0 0.0
    %331 = vmatprep.subr.mxu0 0.0
    %332 = vmatpush1.msra.mxu0 0.0
    %333 = vmatprep.subr.mxu0 0.0
    %334 = vmatpush1.msra.mxu0 0.0
    %335 = vmatprep.subr.mxu0 0.0
    %336 = vmatpush1.msra.mxu0 0.0
    %337 = vmatprep.subr.mxu0 0.0
    %338 = vmatpush1.msra.mxu0 0.0
    %339 = vmatprep.subr.mxu0 0.0
    %340 = vmatpush1.msra.mxu0 0.0
    %341 = vmatprep.subr.mxu0 0.0
    %342 = vmatpush1.msra.mxu0 %v274
    %343 = vmatprep.subr.mxu0 0.0
    %344 = vmatpush1.msra.mxu0 %v273
    %345 = vmatprep.subr.mxu0 0.0
    %346 = vmatpush2.msra.mxu0 0.0
    %347 = vmatprep.subr.mxu0 0.0
    %348 = vmatpush2.msra.mxu0 0.0
    %349 = vmatprep.subr.mxu0 0.0
    %350 = vmatpush2.msra.mxu0 0.0
    %351 = vmatprep.subr.mxu0 0.0
    %352 = vmatpush2.msra.mxu0 0.0
    %353 = vmatprep.subr.mxu0 0.0
    %354 = vmatpush2.msra.mxu0 0.0
    %355 = vmatprep.subr.mxu0 0.0
    %356 = vmatpush2.msra.mxu0 0.0
    %357 = vmatprep.subr.mxu0 0.0
    %358 = vmatpush2.msra.mxu0 0.0
    %359 = vmatprep.subr.mxu0 0.0
    %360 = vmatpush2.msra.mxu0 0.0
    %361 = vmatprep.subr.mxu0 0.0
    %362 = vmatpush2.msra.mxu0 0.0
    %363 = vmatprep.subr.mxu0 0.0
    %364 = vmatpush2.msra.mxu0 0.0
    %365 = vmatprep.subr.mxu0 0.0
    %366 = vmatpush2.msra.mxu0 0.0
    %367 = vmatprep.subr.mxu0 0.0
    %368 = vmatpush2.msra.mxu0 0.0
    %369 = vmatprep.subr.mxu0 0.0
    %370 = vmatpush2.msra.mxu0 0.0
    %371 = vmatprep.subr.mxu0 0.0
    %372 = vmatpush2.msra.mxu0 0.0
    %373 = vmatprep.subr.mxu0 0.0
    %374 = vmatpush2.msra.mxu0 0.0
    %375 = vmatprep.subr.mxu0 0.0
    %376 = vmatpush2.msra.mxu0 0.0
    %377 = vmatprep.mubr.f32.mxu0 0.0
    %378 = vmatmul.mubr.f32.gmra.mxu0 %v308
    %v379 = vpop.f32.mrf.mxu0
    %v380 = vadd.f32 0.0, %v379
    %v381 = vpop.f32.mrf.mxu0
    %382 = vmatprep.mubr.f32.mxu0 0.0
    %383 = vmatmul.mubr.f32.gmra.mxu0 %v311
    %v384 = vpop.f32.mrf.mxu0
    %v385 = vadd.f32 0.0, %v384
    %v386 = vpop.f32.mrf.mxu0
    %387 = vdwg.mxu0
    %v389 = vsel %vm152, %v185, 0
    %v392 = vsel %vm152, %v186, 0
    %394 = vmatprep.subr.mxu0 0.0
    %395 = vmatpush1.msra.mxu0 0.0
    %396 = vmatprep.subr.mxu0 0.0
    %397 = vmatpush1.msra.mxu0 0.0
    %398 = vmatprep.subr.mxu0 0.0
    %399 = vmatpush1.msra.mxu0 0.0
    %400 = vmatprep.subr.mxu0 0.0
    %401 = vmatpush1.msra.mxu0 0.0
    %402 = vmatprep.subr.mxu0 0.0
    %403 = vmatpush1.msra.mxu0 0.0
    %404 = vmatprep.subr.mxu0 0.0
    %405 = vmatpush1.msra.mxu0 0.0
    %406 = vmatprep.subr.mxu0 0.0
    %407 = vmatpush1.msra.mxu0 0.0
    %408 = vmatprep.subr.mxu0 0.0
    %409 = vmatpush1.msra.mxu0 0.0
    %410 = vmatprep.subr.mxu0 0.0
    %411 = vmatpush1.msra.mxu0 0.0
    %412 = vmatprep.subr.mxu0 0.0
    %413 = vmatpush1.msra.mxu0 0.0
    %414 = vmatprep.subr.mxu0 0.0
    %415 = vmatpush1.msra.mxu0 0.0
    %416 = vmatprep.subr.mxu0 0.0
    %417 = vmatpush1.msra.mxu0 0.0
    %418 = vmatprep.subr.mxu0 0.0
    %419 = vmatpush1.msra.mxu0 0.0
    %420 = vmatprep.subr.mxu0 0.0
    %421 = vmatpush1.msra.mxu0 0.0
    %422 = vmatprep.subr.mxu0 0.0
    %423 = vmatpush1.msra.mxu0 %v385
    %424 = vmatprep.subr.mxu0 0.0
    %425 = vmatpush1.msra.mxu0 %v380
    %426 = vmatprep.subr.mxu0 0.0
    %427 = vmatpush2.msra.mxu0 0.0
    %428 = vmatprep.subr.mxu0 0.0
    %429 = vmatpush2.msra.mxu0 0.0
    %430 = vmatprep.subr.mxu0 0.0
    %431 = vmatpush2.msra.mxu0 0.0
    %432 = vmatprep.subr.mxu0 0.0
    %433 = vmatpush2.msra.mxu0 0.0
    %434 = vmatprep.subr.mxu0 0.0
    %435 = vmatpush2.msra.mxu0 0.0
    %436 = vmatprep.subr.mxu0 0.0
    %437 = vmatpush2.msra.mxu0 0.0
    %438 = vmatprep.subr.mxu0 0.0
    %439 = vmatpush2.msra.mxu0 0.0
    %440 = vmatprep.subr.mxu0 0.0
    %441 = vmatpush2.msra.mxu0 0.0
    %442 = vmatprep.subr.mxu0 0.0
    %443 = vmatpush2.msra.mxu0 0.0
    %444 = vmatprep.subr.mxu0 0.0
    %445 = vmatpush2.msra.mxu0 0.0
    %446 = vmatprep.subr.mxu0 0.0
    %447 = vmatpush2.msra.mxu0 0.0
    %448 = vmatprep.subr.mxu0 0.0
    %449 = vmatpush2.msra.mxu0 0.0
    %450 = vmatprep.subr.mxu0 0.0
    %451 = vmatpush2.msra.mxu0 0.0
    %452 = vmatprep.subr.mxu0 0.0
    %453 = vmatpush2.msra.mxu0 0.0
    %454 = vmatprep.subr.mxu0 0.0
    %455 = vmatpush2.msra.mxu0 0.0
    %456 = vmatprep.subr.mxu0 0.0
    %457 = vmatpush2.msra.mxu0 0.0
    %458 = vmatprep.mubr.f32.mxu0 0.0
    %459 = vmatmul.mubr.f32.gmra.mxu0 %v389
    %v460 = vpop.f32.mrf.mxu0
    %v461 = vadd.f32 0.0, %v460
    %v462 = vpop.f32.mrf.mxu0
    %463 = vmatprep.mubr.f32.mxu0 0.0
    %464 = vmatmul.mubr.f32.gmra.mxu0 %v392
    %v465 = vpop.f32.mrf.mxu0
    %v466 = vadd.f32 0.0, %v465
    %v467 = vpop.f32.mrf.mxu0
    %468 = vdwg.mxu0
    %v469 = vmul.f32 %v183, %v461
    %v470 = vmul.f32 %v184, %v466
    %v471 = vld [vmem:[%s4] sm:$0x1]
    %v473 = vlaneseq
    %v474 = vshrl.u32 %v473, 7
    %v475 = vsub.s32 0, %v474
    %v476 = vrot.slane %v471, %v475
    %v478 = vadd.f32 %v469, %v476
    %v479 = vadd.f32 %v470, %v476
    %v480 = vtanh.pop %v478
    %v481 = vtanh.pop %v479
    %v482 = vsel %vm191, %v480, 0.0
    %v483 = vsel %vm191, %v481, 0.0
    %v484 = vadd.f32 %v482, %v483
    %v485 = vrot.slane %v484, 4
    %v486 = vadd.f32 %v484, %v485
    %v487 = vrot.slane %v486, 2
    %v488 = vadd.f32 %v486, %v487
    %v489 = vrot.slane %v488, 1
    %v490 = vadd.f32 %v488, %v489
    %v491 = vrcp.pop 16.0
    %v492 = vmul.f32 %v490, %v491
    %v493 = vsub.f32 %v480, %v492
    %v494 = vsub.f32 %v481, %v492
    %v495 = vmul.f32 %v493, %v493
    %v496 = vmul.f32 %v494, %v494
    %v497 = vsel %vm191, %v495, 0.0
    %v498 = vsel %vm191, %v496, 0.0
    %v499 = vadd.f32 %v497, %v498
    %v500 = vrot.slane %v499, 4
    %v501 = vadd.f32 %v499, %v500
    %v502 = vrot.slane %v501, 2
    %v503 = vadd.f32 %v501, %v502
    %v504 = vrot.slane %v503, 1
    %v505 = vadd.f32 %v503, %v504
    %v506 = vrcp.pop 15.0
    %v507 = vmul.f32 %v505, %v506
    %v508 = vrsqrt.pop %v507
    %v509 = vmul.f32 %v507, %v508
    %vm510 = vcmp.eq.f32.partialorder %v507, inf
    %v511 = vsel %vm510, %v507, %v509
    %vm512 = vcmp.eq.f32.partialorder %v507, 0.0
    %v513 = vand.u32 %v507, 2147483648
    %v514 = vsel %vm512, %v513, %v511
    %v515 = vld [vmem:[#allocation10] sm:$0xff]
    %v516 = vld [vmem:[#allocation10 + $0x8] sm:$0xff]
    %v517 = vmul.f32 %v515, %v493
    %v518 = vmul.f32 %v516, %v494
    %v519 = vadd.f32 %v514, 1e-10
    %v520 = vrcp.pop %v519
    %v521 = vmul.f32 %v517, %v520
    %v522 = vmul.f32 %v518, %v520
    %v523 = vld [vmem:[#allocation11] sm:$0xff]
    %v524 = vld [vmem:[#allocation11 + $0x8] sm:$0xff]
    %v525 = vadd.f32 %v521, %v523
    %v526 = vadd.f32 %v522, %v524
    %v527 = vld [vmem:[#allocation13] sm:$0xff]
    %v528 = vld [vmem:[#allocation13 + $0x8] sm:$0xff]
    %v529 = vld [vmem:[#allocation13 + $0x10] sm:$0xff]
    %v530 = vld [vmem:[#allocation13 + $0x18] sm:$0xff]
    %531 = vmatprep.subr.mxu0 0.0
    %532 = vmatpush1.msra.mxu0 0.0
    %533 = vmatprep.subr.mxu0 0.0
    %534 = vmatpush1.msra.mxu0 0.0
    %535 = vmatprep.subr.mxu0 0.0
    %536 = vmatpush1.msra.mxu0 0.0
    %537 = vmatprep.subr.mxu0 0.0
    %538 = vmatpush1.msra.mxu0 0.0
    %539 = vmatprep.subr.mxu0 0.0
    %540 = vmatpush1.msra.mxu0 0.0
    %541 = vmatprep.subr.mxu0 0.0
    %542 = vmatpush1.msra.mxu0 0.0
    %543 = vmatprep.subr.mxu0 0.0
    %544 = vmatpush1.msra.mxu0 0.0
    %545 = vmatprep.subr.mxu0 0.0
    %546 = vmatpush1.msra.mxu0 0.0
    %547 = vmatprep.subr.mxu0 0.0
    %548 = vmatpush1.msra.mxu0 0.0
    %549 = vmatprep.subr.mxu0 0.0
    %550 = vmatpush1.msra.mxu0 0.0
    %551 = vmatprep.subr.mxu0 0.0
    %552 = vmatpush1.msra.mxu0 0.0
    %553 = vmatprep.subr.mxu0 0.0
    %554 = vmatpush1.msra.mxu0 0.0
    %555 = vmatprep.subr.mxu0 0.0
    %556 = vmatpush1.msra.mxu0 %v530
    %557 = vmatprep.subr.mxu0 0.0
    %558 = vmatpush1.msra.mxu0 %v529
    %559 = vmatprep.subr.mxu0 0.0
    %560 = vmatpush1.msra.mxu0 %v528
    %561 = vmatprep.subr.mxu0 0.0
    %562 = vmatpush1.msra.mxu0 %v527
    %563 = vmatprep.subr.mxu0 0.0
    %564 = vmatpush2.msra.mxu0 0.0
    %565 = vmatprep.subr.mxu0 0.0
    %566 = vmatpush2.msra.mxu0 0.0
    %567 = vmatprep.subr.mxu0 0.0
    %568 = vmatpush2.msra.mxu0 0.0
    %569 = vmatprep.subr.mxu0 0.0
    %570 = vmatpush2.msra.mxu0 0.0
    %571 = vmatprep.subr.mxu0 0.0
    %572 = vmatpush2.msra.mxu0 0.0
    %573 = vmatprep.subr.mxu0 0.0
    %574 = vmatpush2.msra.mxu0 0.0
    %575 = vmatprep.subr.mxu0 0.0
    %576 = vmatpush2.msra.mxu0 0.0
    %577 = vmatprep.subr.mxu0 0.0
    %578 = vmatpush2.msra.mxu0 0.0
    %579 = vmatprep.subr.mxu0 0.0
    %580 = vmatpush2.msra.mxu0 0.0
    %581 = vmatprep.subr.mxu0 0.0
    %582 = vmatpush2.msra.mxu0 0.0
    %583 = vmatprep.subr.mxu0 0.0
    %584 = vmatpush2.msra.mxu0 0.0
    %585 = vmatprep.subr.mxu0 0.0
    %586 = vmatpush2.msra.mxu0 0.0
    %587 = vmatprep.subr.mxu0 0.0
    %588 = vmatpush2.msra.mxu0 0.0
    %589 = vmatprep.subr.mxu0 0.0
    %590 = vmatpush2.msra.mxu0 0.0
    %591 = vmatprep.subr.mxu0 0.0
    %592 = vmatpush2.msra.mxu0 0.0
    %593 = vmatprep.subr.mxu0 0.0
    %594 = vmatpush2.msra.mxu0 0.0
    %595 = vmatprep.mubr.f32.mxu0 0.0
    %596 = vmatmul.mubr.f32.gmra.mxu0 %v193
    %v597 = vpop.f32.mrf.mxu0
    %v598 = vadd.f32 0.0, %v597
    %v599 = vpop.f32.mrf.mxu0
    %600 = vmatprep.mubr.f32.mxu0 0.0
    %601 = vmatmul.mubr.f32.gmra.mxu0 %v196
    %v602 = vpop.f32.mrf.mxu0
    %v603 = vadd.f32 0.0, %v602
    %v604 = vpop.f32.mrf.mxu0
    %605 = vdwg.mxu0
    %v606 = vmul.f32 %v598, %v598
    %v607 = vmul.f32 %v603, %v603
    %610 = vrot.lane.b32.xlu0 %v606, 32
    %v611 = vpop.permute.xlu0 %610
    %612 = vrot.lane.b32.xlu0 %v607, 32
    %v613 = vpop.permute.xlu0 %612
    %v616 = vsel %vm191, %v598, %v611
    %v617 = vsel %vm191, %v603, %v613
    %v619 = vsel %vm152, %v147, 0
    %v622 = vsel %vm152, %v148, 0
    %624 = vmatprep.subr.mxu0 0.0
    %625 = vmatpush1.msra.mxu0 0.0
    %626 = vmatprep.subr.mxu0 0.0
    %627 = vmatpush1.msra.mxu0 0.0
    %628 = vmatprep.subr.mxu0 0.0
    %629 = vmatpush1.msra.mxu0 0.0
    %630 = vmatprep.subr.mxu0 0.0
    %631 = vmatpush1.msra.mxu0 0.0
    %632 = vmatprep.subr.mxu0 0.0
    %633 = vmatpush1.msra.mxu0 0.0
    %634 = vmatprep.subr.mxu0 0.0
    %635 = vmatpush1.msra.mxu0 0.0
    %636 = vmatprep.subr.mxu0 0.0
    %637 = vmatpush1.msra.mxu0 0.0
    %638 = vmatprep.subr.mxu0 0.0
    %639 = vmatpush1.msra.mxu0 0.0
    %640 = vmatprep.subr.mxu0 0.0
    %641 = vmatpush1.msra.mxu0 0.0
    %642 = vmatprep.subr.mxu0 0.0
    %643 = vmatpush1.msra.mxu0 0.0
    %644 = vmatprep.subr.mxu0 0.0
    %645 = vmatpush1.msra.mxu0 0.0
    %646 = vmatprep.subr.mxu0 0.0
    %647 = vmatpush1.msra.mxu0 0.0
    %648 = vmatprep.subr.mxu0 0.0
    %649 = vmatpush1.msra.mxu0 0.0
    %650 = vmatprep.subr.mxu0 0.0
    %651 = vmatpush1.msra.mxu0 0.0
    %652 = vmatprep.subr.mxu0 0.0
    %653 = vmatpush1.msra.mxu0 %v617
    %654 = vmatprep.subr.mxu0 0.0
    %655 = vmatpush1.msra.mxu0 %v616
    %656 = vmatprep.subr.mxu0 0.0
    %657 = vmatpush2.msra.mxu0 0.0
    %658 = vmatprep.subr.mxu0 0.0
    %659 = vmatpush2.msra.mxu0 0.0
    %660 = vmatprep.subr.mxu0 0.0
    %661 = vmatpush2.msra.mxu0 0.0
    %662 = vmatprep.subr.mxu0 0.0
    %663 = vmatpush2.msra.mxu0 0.0
    %664 = vmatprep.subr.mxu0 0.0
    %665 = vmatpush2.msra.mxu0 0.0
    %666 = vmatprep.subr.mxu0 0.0
    %667 = vmatpush2.msra.mxu0 0.0
    %668 = vmatprep.subr.mxu0 0.0
    %669 = vmatpush2.msra.mxu0 0.0
    %670 = vmatprep.subr.mxu0 0.0
    %671 = vmatpush2.msra.mxu0 0.0
    %672 = vmatprep.subr.mxu0 0.0
    %673 = vmatpush2.msra.mxu0 0.0
    %674 = vmatprep.subr.mxu0 0.0
    %675 = vmatpush2.msra.mxu0 0.0
    %676 = vmatprep.subr.mxu0 0.0
    %677 = vmatpush2.msra.mxu0 0.0
    %678 = vmatprep.subr.mxu0 0.0
    %679 = vmatpush2.msra.mxu0 0.0
    %680 = vmatprep.subr.mxu0 0.0
    %681 = vmatpush2.msra.mxu0 0.0
    %682 = vmatprep.subr.mxu0 0.0
    %683 = vmatpush2.msra.mxu0 0.0
    %684 = vmatprep.subr.mxu0 0.0
    %685 = vmatpush2.msra.mxu0 0.0
    %686 = vmatprep.subr.mxu0 0.0
    %687 = vmatpush2.msra.mxu0 0.0
    %688 = vmatprep.mubr.f32.mxu0 0.0
    %689 = vmatmul.mubr.f32.gmra.mxu0 %v619
    %v690 = vpop.f32.mrf.mxu0
    %v691 = vadd.f32 0.0, %v690
    %v692 = vpop.f32.mrf.mxu0
    %693 = vmatprep.mubr.f32.mxu0 0.0
    %694 = vmatmul.mubr.f32.gmra.mxu0 %v622
    %v695 = vpop.f32.mrf.mxu0
    %v696 = vadd.f32 0.0, %v695
    %v697 = vpop.f32.mrf.mxu0
    %698 = vdwg.mxu0
    %699 = vadd.xlane.f32.xlu0 %v153
    %v700 = vpop.xlane.xlu0 %699
    %701 = vadd.xlane.f32.xlu0 %v154
    %v702 = vpop.xlane.xlu0 %701
    %v703 = vsub.f32 %v700, 1.0
    %v704 = vsub.f32 %v702, 1.0
    %v705 = vmul.f32 %v700, %v703
    %v706 = vmul.f32 %v702, %v704
    %v707 = vmul.f32 %v705, 0.5
    %v708 = vmul.f32 %v706, 0.5
    %vm709 = vcmp.eq.f32.partialorder %v707, 0.0
    %vm710 = vcmp.eq.f32.partialorder %v708, 0.0
    %v711 = vrcp.pop %v707
    %v712 = vrcp.pop %v708
    %v713 = vsel %vm709, 0.0, %v711
    %v714 = vsel %vm710, 0.0, %v712
    %v715 = vlaneseq
    %v716 = vshrl.u32 %v715, 7
    %v717 = vadd.s32 %v716, 8
    %vm718 = vcmp.lt.s32.totalorder %v716, 8
    %vm719 = vcmp.lt.s32.totalorder %v717, 8
    %v720 = vsel %vm718, %v598, %v691
    %v721 = vsel %vm719, %v603, %v696
    %v722 = vsel %vm718, %v691, %v598
    %v723 = vsel %vm719, %v696, %v603
    %v724 = vld [vmem:[#allocation14] sm:$0xff]
    %v725 = vld [vmem:[#allocation14 + $0x8] sm:$0xff]
    %v726 = vld [vmem:[#allocation14 + $0x10] sm:$0xff]
    %v727 = vld [vmem:[#allocation14 + $0x18] sm:$0xff]
    %v729 = vsel %vm191, %v720, 0
    %v732 = vsel %vm191, %v721, 0
    %734 = vmatprep.subr.mxu0 0.0
    %735 = vmatpush1.msra.mxu0 0.0
    %736 = vmatprep.subr.mxu0 0.0
    %737 = vmatpush1.msra.mxu0 0.0
    %738 = vmatprep.subr.mxu0 0.0
    %739 = vmatpush1.msra.mxu0 0.0
    %740 = vmatprep.subr.mxu0 0.0
    %741 = vmatpush1.msra.mxu0 0.0
    %742 = vmatprep.subr.mxu0 0.0
    %743 = vmatpush1.msra.mxu0 0.0
    %744 = vmatprep.subr.mxu0 0.0
    %745 = vmatpush1.msra.mxu0 0.0
    %746 = vmatprep.subr.mxu0 0.0
    %747 = vmatpush1.msra.mxu0 0.0
    %748 = vmatprep.subr.mxu0 0.0
    %749 = vmatpush1.msra.mxu0 0.0
    %750 = vmatprep.subr.mxu0 0.0
    %751 = vmatpush1.msra.mxu0 0.0
    %752 = vmatprep.subr.mxu0 0.0
    %753 = vmatpush1.msra.mxu0 0.0
    %754 = vmatprep.subr.mxu0 0.0
    %755 = vmatpush1.msra.mxu0 0.0
    %756 = vmatprep.subr.mxu0 0.0
    %757 = vmatpush1.msra.mxu0 0.0
    %758 = vmatprep.subr.mxu0 0.0
    %759 = vmatpush1.msra.mxu0 %v727
    %760 = vmatprep.subr.mxu0 0.0
    %761 = vmatpush1.msra.mxu0 %v726
    %762 = vmatprep.subr.mxu0 0.0
    %763 = vmatpush1.msra.mxu0 %v725
    %764 = vmatprep.subr.mxu0 0.0
    %765 = vmatpush1.msra.mxu0 %v724
    %766 = vmatprep.subr.mxu0 0.0
    %767 = vmatpush2.msra.mxu0 0.0
    %768 = vmatprep.subr.mxu0 0.0
    %769 = vmatpush2.msra.mxu0 0.0
    %770 = vmatprep.subr.mxu0 0.0
    %771 = vmatpush2.msra.mxu0 0.0
    %772 = vmatprep.subr.mxu0 0.0
    %773 = vmatpush2.msra.mxu0 0.0
    %774 = vmatprep.subr.mxu0 0.0
    %775 = vmatpush2.msra.mxu0 0.0
    %776 = vmatprep.subr.mxu0 0.0
    %777 = vmatpush2.msra.mxu0 0.0
    %778 = vmatprep.subr.mxu0 0.0
    %779 = vmatpush2.msra.mxu0 0.0
    %780 = vmatprep.subr.mxu0 0.0
    %781 = vmatpush2.msra.mxu0 0.0
    %782 = vmatprep.subr.mxu0 0.0
    %783 = vmatpush2.msra.mxu0 0.0
    %784 = vmatprep.subr.mxu0 0.0
    %785 = vmatpush2.msra.mxu0 0.0
    %786 = vmatprep.subr.mxu0 0.0
    %787 = vmatpush2.msra.mxu0 0.0
    %788 = vmatprep.subr.mxu0 0.0
    %789 = vmatpush2.msra.mxu0 0.0
    %790 = vmatprep.subr.mxu0 0.0
    %791 = vmatpush2.msra.mxu0 0.0
    %792 = vmatprep.subr.mxu0 0.0
    %793 = vmatpush2.msra.mxu0 0.0
    %794 = vmatprep.subr.mxu0 0.0
    %795 = vmatpush2.msra.mxu0 0.0
    %796 = vmatprep.subr.mxu0 0.0
    %797 = vmatpush2.msra.mxu0 0.0
    %798 = vmatprep.mubr.f32.mxu0 0.0
    %799 = vmatmul.mubr.f32.gmra.mxu0 %v729
    %v800 = vpop.f32.mrf.mxu0
    %v801 = vadd.f32 0.0, %v800
    %v802 = vpop.f32.mrf.mxu0
    %803 = vmatprep.mubr.f32.mxu0 0.0
    %804 = vmatmul.mubr.f32.gmra.mxu0 %v732
    %v805 = vpop.f32.mrf.mxu0
    %v806 = vadd.f32 0.0, %v805
    %v807 = vpop.f32.mrf.mxu0
    %808 = vdwg.mxu0
    %v809 = vmul.f32 %v801, %v722
    %v810 = vmul.f32 %v806, %v723
    %v811 = vmul.f32 %v691, %v691
    %v812 = vmul.f32 %v696, %v696
    %815 = vrot.lane.b32.xlu0 %v691, 96
    %v816 = vpop.permute.xlu0 %815
    %817 = vrot.lane.b32.xlu0 %v696, 96
    %v818 = vpop.permute.xlu0 %817
    %v821 = vsub.f32 %v811, %v816
    %v822 = vsub.f32 %v812, %v818
    %v823 = vmul.f32 %v821, 0.5
    %v824 = vmul.f32 %v822, 0.5
    %v825 = vadd.f32 %v809, %v823
    %v826 = vadd.f32 %v810, %v824
    %v827 = vmul.f32 %v713, %v825
    %v828 = vmul.f32 %v714, %v826
    %831 = vrot.lane.b32.xlu0 %v827, 32
    %v832 = vpop.permute.xlu0 %831
    %833 = vrot.lane.b32.xlu0 %v828, 32
    %v834 = vpop.permute.xlu0 %833
    %v837 = vsel %vm191, %v525, %v832
    %v838 = vsel %vm191, %v526, %v834
    %vm839 = vcmask 523264
    %840 = vst.msk [vmem:[#allocation16] sm:$0xff] %vm839, %v837
    %841 = vst.msk [vmem:[#allocation16 + $0x8] sm:$0xff] %vm839, %v838
    // Predicated region
    $region74: #{tpu_custom_call.1} parent=1 // pred_check
      _
    $region75: #{tpu_custom_call.1} parent=1 // pred_check_branch
      %843 = sbr.rel (0) target = $region77
    $region76: #{tpu_custom_call.1} parent=1 // pred_region
      %s845 = ssub.s32 256, 256
      %846 = vsyncadd [#allocation4], %s845
      %s847 = sshll.u32 [#allocation16], 4
      %s848 = int_to_ptr.vmem [resolvable:$true] %s847
      %853 = dma.vmem_to_hbm [thread:$0]  %s848, 256, %s10, [#allocation4], 128, 128, 8
    $region77: #{tpu_custom_call.1} parent=1 // pred_fallthru
      _
    // Predicated region
    $region78: #{tpu_custom_call.1} parent=1 // pred_check
      _
    $region79: #{tpu_custom_call.1} parent=1 // pred_check_branch
      %855 = sbr.rel (0) target = $region81
    $region80: #{tpu_custom_call.1} parent=1 // pred_region
      %856 = dma.done [#allocation4], 256
    $region81: #{tpu_custom_call.1} parent=1 // pred_fallthru
      _
    %857 = vsyncpa [#allocation3], 1
    %858 = vsyncpa [#allocation6], 1
    %859 = vsyncpa [#allocation9], 1
    %860 = vsyncpa [#allocation12], 1
    %861 = vsyncpa [#allocation15], 1
    %862 = vsyncpa [#allocation4], 1

</llo_original>
